<compile_context>
chip_gen: v5e
topology: v5e:2x2
jax: 0.10.0
libtpu: 0.0.40
codegen_flags: <defaults>
</compile_context>

<pallas_src>
import jax
import jax.numpy as jnp
from jax.experimental import pallas as pl
from jax.experimental.pallas import tpu as pltpu

ROW_STRIP = 8  # sublane-aligned row-strip height


def _dwconv_kernel(x_ref, wb_ref, o_ref):
    # x_ref : (1, Ct, H, W)  NCHW input block (VMEM)
    # wb_ref: (10, C)        SMEM: rows 0..8 = 3x3 taps (row-major), row 9 = bias
    # o_ref : (1, Ct, H, W)  output block
    Ct = x_ref.shape[1]
    H = x_ref.shape[2]
    W = x_ref.shape[3]
    c0 = pl.program_id(0) * Ct            # global channel offset of this tile
    f32 = jnp.float32
    n_strips = (H + ROW_STRIP - 1) // ROW_STRIP

    def channel_body(c, carry):
        cg = c0 + c
        # Per-channel 3x3 taps + bias: cheap scalar SMEM reads, hoisted out of
        # the strip loop (splat-broadcast by the VPU at each use).
        w00 = wb_ref[0, cg]; w01 = wb_ref[1, cg]; w02 = wb_ref[2, cg]
        w10 = wb_ref[3, cg]; w11 = wb_ref[4, cg]; w12 = wb_ref[5, cg]
        w20 = wb_ref[6, cg]; w21 = wb_ref[7, cg]; w22 = wb_ref[8, cg]
        bias = wb_ref[9, cg]

        def slab(h_start, rows):
            # (1, rows, W) f32 slab of input rows [h_start, h_start+rows).
            return x_ref[0, pl.ds(c, 1), pl.ds(h_start, rows), :].astype(f32)

        def shift_right(s):
            # tap reading x[.., w-1]; zero column at w == 0 (in-register).
            z = jnp.zeros(s.shape[:-1] + (1,), f32)
            return jnp.concatenate([z, s[..., :W - 1]], axis=-1)

        def shift_left(s):
            # tap reading x[.., w+1]; zero column at w == W-1 (in-register).
            z = jnp.zeros(s.shape[:-1] + (1,), f32)
            return jnp.concatenate([s[..., 1:], z], axis=-1)

        def do_strip(h0, hs, first, last):
            mid = slab(h0, hs)                       # rows h0 .. h0+hs-1
            zrow = jnp.zeros((1, 1, W), f32)
            if first:                                # row -1 is zero padding
                top = (jnp.concatenate([zrow, mid[:, :hs - 1, :]], axis=1)
                       if hs > 1 else zrow)
            else:
                top = slab(h0 - 1, hs)               # rows h0-1 .. h0+hs-2
            if last:                                 # row H is zero padding
                bot = (jnp.concatenate([mid[:, 1:, :], zrow], axis=1)
                       if hs > 1 else zrow)
            else:
                bot = slab(h0 + 1, hs)               # rows h0+1 .. h0+hs

            acc = mid * w11 + bias                   # bias folded into init
            acc = acc + shift_right(mid) * w10 + shift_left(mid) * w12
            acc = acc + top * w01 + shift_right(top) * w00 + shift_left(top) * w02
            acc = acc + bot * w21 + shift_right(bot) * w20 + shift_left(bot) * w22
            o_ref[0, pl.ds(c, 1), pl.ds(h0, hs), :] = acc.astype(o_ref.dtype)

        # First strip: top zero row handled statically.
        do_strip(0, min(ROW_STRIP, H), first=True, last=(n_strips == 1))
        # Interior strips (only traced when present): compact fori body.
        if n_strips > 2:
            def strip_body(s, carry2):
                h0 = pl.multiple_of(s * ROW_STRIP, ROW_STRIP)
                do_strip(h0, ROW_STRIP, first=False, last=False)
                return carry2
            jax.lax.fori_loop(1, n_strips - 1, strip_body, 0)
        # Last strip: bottom zero row handled statically.
        if n_strips > 1:
            h0_last = (n_strips - 1) * ROW_STRIP
            do_strip(h0_last, H - h0_last, first=False, last=True)
        return carry

    jax.lax.fori_loop(0, Ct, channel_body, 0)


def dwconv3x3(x, w, b, *, block_budget_bytes=4 * 1024 * 1024):
    """Depthwise 3x3 conv, stride 1, padding 1, with bias. NCHW in/out.

    x: (N, C, H, W); w: (C, 3, 3) (PyTorch (C,1,3,3) squeezed); b: (C,)
    """
    N, C, H, W = x.shape

    # (10, C) f32 scalar table: rows 0..8 = the 9 filter taps (row-major),
    # row 9 = bias. Tiny; lives in SMEM, fetched once for the whole grid.
    wb = jnp.concatenate(
        [jnp.transpose(w.reshape(C, 9)), b.reshape(1, C)], axis=0
    ).astype(jnp.float32)

    # Channel tile from a VMEM budget: block (1, c_tile, H, W); ~2x in + 2x out
    # double-buffered blocks must stay well under the scoped VMEM limit.
    plane_bytes = H * W * x.dtype.itemsize
    max_ct = max(1, block_budget_bytes // plane_bytes)
    c_tile = 1
    for d in range(1, C + 1):
        if C % d == 0 and d <= max_ct:
            c_tile = d
    num_ct = C // c_tile

    return pl.pallas_call(
        _dwconv_kernel,
        out_shape=jax.ShapeDtypeStruct((N, C, H, W), x.dtype),
        grid_spec=pltpu.PrefetchScalarGridSpec(
            num_scalar_prefetch=0,
            grid=(num_ct, N),          # channel-tile outer, batch inner
            in_specs=[
                pl.BlockSpec((1, c_tile, H, W), lambda c, n: (n, c, 0, 0)),
                pl.BlockSpec(memory_space=pltpu.MemorySpace.SMEM),
            ],
            out_specs=pl.BlockSpec((1, c_tile, H, W), lambda c, n: (n, c, 0, 0)),
        ),
        compiler_params=pltpu.CompilerParams(
            dimension_semantics=("parallel", "parallel"),
            vmem_limit_bytes=48 * 1024 * 1024),
    )(x, wb)


if __name__ == "__main__":
    # Small shapes consistent with the module: DWConv(dim=C) applied to NCHW.
    N, C, H, W = 2, 4, 16, 16

    key = jax.random.PRNGKey(0)
    kx, kw, kb = jax.random.split(key, 3)

    x = jax.random.normal(kx, (N, C, H, W), dtype=jnp.float32)
    # nn.Conv2d(dim, dim, 3, 1, 1, groups=dim) weight shape: (C, 1, 3, 3)
    w = jax.random.normal(kw, (C, 3, 3), dtype=jnp.float32) * 0.1
    b = jax.random.normal(kb, (C,), dtype=jnp.float32) * 0.1

    out = dwconv3x3(x, w, b)
    out = jax.block_until_ready(out)

    # Reference check against XLA's grouped conv.
    ref = jax.lax.conv_general_dilated(
        x, w.reshape(C, 1, 3, 3),
        window_strides=(1, 1), padding=((1, 1), (1, 1)),
        feature_group_count=C,
        dimension_numbers=("NCHW", "OIHW", "NCHW"),
    ) + b.reshape(1, C, 1, 1)

    assert out.shape == (N, C, H, W)
    assert jnp.allclose(out, ref, atol=1e-5, rtol=1e-5)
    print("KERNEL_OK")
</pallas_src>

<mosaic_0001>
module attributes {stable_mosaic.version = 11 : i64} {
  func.func @_dwconv_kernel(%arg0: i32, %arg1: i32, %arg2: memref<1x4x16x16xf32, #tpu.memory_space<vmem>>, %arg3: memref<10x4xf32, #tpu.memory_space<smem>>, %arg4: memref<1x4x16x16xf32, #tpu.memory_space<vmem>>) attributes {dimension_semantics = [#tpu.dimension_semantics<parallel>, #tpu.dimension_semantics<parallel>], iteration_bounds = array<i64: 1, 2>, scalar_prefetch = 0 : i64, scratch_operands = 0 : i64, tpu.core_type = #tpu.core_type<tc>, window_params = [{transform_indices = @transform_0, window_bounds = array<i64: 1, 4, 16, 16>}, {transform_indices = @transform_1, window_bounds = array<i64: 10, 4>}, {transform_indices = @transform_2, window_bounds = array<i64: 1, 4, 16, 16>}]} {
    %c4_i32 = arith.constant 4 : i32
    %0 = arith.muli %arg0, %c4_i32 : i32
    %c0_i32 = arith.constant 0 : i32
    %c4_i32_0 = arith.constant 4 : i32
    %1 = arith.addi %c0_i32, %c4_i32_0 : i32
    %c1_i32 = arith.constant 1 : i32
    scf.for %arg5 = %c0_i32 to %1 step %c1_i32  : i32 {
      %2 = arith.addi %0, %arg5 : i32
      %c0 = arith.constant 0 : index
      %3 = arith.index_cast %2 : i32 to index
      %4 = memref.load %arg3[%c0, %3] : memref<10x4xf32, #tpu.memory_space<smem>>
      %c1 = arith.constant 1 : index
      %5 = arith.index_cast %2 : i32 to index
      %6 = memref.load %arg3[%c1, %5] : memref<10x4xf32, #tpu.memory_space<smem>>
      %c2 = arith.constant 2 : index
      %7 = arith.index_cast %2 : i32 to index
      %8 = memref.load %arg3[%c2, %7] : memref<10x4xf32, #tpu.memory_space<smem>>
      %c3 = arith.constant 3 : index
      %9 = arith.index_cast %2 : i32 to index
      %10 = memref.load %arg3[%c3, %9] : memref<10x4xf32, #tpu.memory_space<smem>>
      %c4 = arith.constant 4 : index
      %11 = arith.index_cast %2 : i32 to index
      %12 = memref.load %arg3[%c4, %11] : memref<10x4xf32, #tpu.memory_space<smem>>
      %c5 = arith.constant 5 : index
      %13 = arith.index_cast %2 : i32 to index
      %14 = memref.load %arg3[%c5, %13] : memref<10x4xf32, #tpu.memory_space<smem>>
      %c6 = arith.constant 6 : index
      %15 = arith.index_cast %2 : i32 to index
      %16 = memref.load %arg3[%c6, %15] : memref<10x4xf32, #tpu.memory_space<smem>>
      %c7 = arith.constant 7 : index
      %17 = arith.index_cast %2 : i32 to index
      %18 = memref.load %arg3[%c7, %17] : memref<10x4xf32, #tpu.memory_space<smem>>
      %c8 = arith.constant 8 : index
      %19 = arith.index_cast %2 : i32 to index
      %20 = memref.load %arg3[%c8, %19] : memref<10x4xf32, #tpu.memory_space<smem>>
      %c9 = arith.constant 9 : index
      %21 = arith.index_cast %2 : i32 to index
      %22 = memref.load %arg3[%c9, %21] : memref<10x4xf32, #tpu.memory_space<smem>>
      %c0_2 = arith.constant 0 : index
      %23 = arith.index_cast %arg5 : i32 to index
      %c0_3 = arith.constant 0 : index
      %c0_4 = arith.constant 0 : index
      %24 = vector.load %arg2[%c0_2, %23, %c0_3, %c0_4] : memref<1x4x16x16xf32, #tpu.memory_space<vmem>>, vector<1x1x8x16xf32>
      %25 = vector.shape_cast %24 : vector<1x1x8x16xf32> to vector<1x8x16xf32>
      %cst = arith.constant 0.000000e+00 : f32
      %26 = vector.broadcast %cst : f32 to vector<1x1x16xf32>
      %27 = vector.extract_strided_slice %25 {offsets = [0, 0, 0], sizes = [1, 7, 16], strides = [1, 1, 1]} : vector<1x8x16xf32> to vector<1x7x16xf32>
      %28 = tpu.concatenate %26, %27 in 1 : vector<1x1x16xf32>, vector<1x7x16xf32> -> vector<1x8x16xf32>
      %c0_5 = arith.constant 0 : index
      %29 = arith.index_cast %arg5 : i32 to index
      %c1_6 = arith.constant 1 : index
      %c0_7 = arith.constant 0 : index
      %30 = vector.load %arg2[%c0_5, %29, %c1_6, %c0_7] : memref<1x4x16x16xf32, #tpu.memory_space<vmem>>, vector<1x1x8x16xf32>
      %31 = vector.shape_cast %30 : vector<1x1x8x16xf32> to vector<1x8x16xf32>
      %32 = vector.broadcast %12 : f32 to vector<1x8x16xf32>
      %33 = arith.mulf %25, %32 : vector<1x8x16xf32>
      %34 = vector.broadcast %22 : f32 to vector<1x8x16xf32>
      %35 = arith.addf %33, %34 : vector<1x8x16xf32>
      %cst_8 = arith.constant 0.000000e+00 : f32
      %36 = vector.broadcast %cst_8 : f32 to vector<1x8x1xf32>
      %37 = vector.extract_strided_slice %25 {offsets = [0, 0, 0], sizes = [1, 8, 15], strides = [1, 1, 1]} : vector<1x8x16xf32> to vector<1x8x15xf32>
      %38 = tpu.concatenate %36, %37 in 2 : vector<1x8x1xf32>, vector<1x8x15xf32> -> vector<1x8x16xf32>
      %39 = vector.broadcast %10 : f32 to vector<1x8x16xf32>
      %40 = arith.mulf %38, %39 : vector<1x8x16xf32>
      %41 = arith.addf %35, %40 : vector<1x8x16xf32>
      %cst_9 = arith.constant 0.000000e+00 : f32
      %42 = vector.broadcast %cst_9 : f32 to vector<1x8x1xf32>
      %43 = vector.extract_strided_slice %25 {offsets = [0, 0, 1], sizes = [1, 8, 15], strides = [1, 1, 1]} : vector<1x8x16xf32> to vector<1x8x15xf32>
      %44 = tpu.concatenate %43, %42 in 2 : vector<1x8x15xf32>, vector<1x8x1xf32> -> vector<1x8x16xf32>
      %45 = vector.broadcast %14 : f32 to vector<1x8x16xf32>
      %46 = arith.mulf %44, %45 : vector<1x8x16xf32>
      %47 = arith.addf %41, %46 : vector<1x8x16xf32>
      %48 = vector.broadcast %6 : f32 to vector<1x8x16xf32>
      %49 = arith.mulf %28, %48 : vector<1x8x16xf32>
      %50 = arith.addf %47, %49 : vector<1x8x16xf32>
      %cst_10 = arith.constant 0.000000e+00 : f32
      %51 = vector.broadcast %cst_10 : f32 to vector<1x8x1xf32>
      %52 = vector.extract_strided_slice %28 {offsets = [0, 0, 0], sizes = [1, 8, 15], strides = [1, 1, 1]} : vector<1x8x16xf32> to vector<1x8x15xf32>
      %53 = tpu.concatenate %51, %52 in 2 : vector<1x8x1xf32>, vector<1x8x15xf32> -> vector<1x8x16xf32>
      %54 = vector.broadcast %4 : f32 to vector<1x8x16xf32>
      %55 = arith.mulf %53, %54 : vector<1x8x16xf32>
      %56 = arith.addf %50, %55 : vector<1x8x16xf32>
      %cst_11 = arith.constant 0.000000e+00 : f32
      %57 = vector.broadcast %cst_11 : f32 to vector<1x8x1xf32>
      %58 = vector.extract_strided_slice %28 {offsets = [0, 0, 1], sizes = [1, 8, 15], strides = [1, 1, 1]} : vector<1x8x16xf32> to vector<1x8x15xf32>
      %59 = tpu.concatenate %58, %57 in 2 : vector<1x8x15xf32>, vector<1x8x1xf32> -> vector<1x8x16xf32>
      %60 = vector.broadcast %8 : f32 to vector<1x8x16xf32>
      %61 = arith.mulf %59, %60 : vector<1x8x16xf32>
      %62 = arith.addf %56, %61 : vector<1x8x16xf32>
      %63 = vector.broadcast %18 : f32 to vector<1x8x16xf32>
      %64 = arith.mulf %31, %63 : vector<1x8x16xf32>
      %65 = arith.addf %62, %64 : vector<1x8x16xf32>
      %cst_12 = arith.constant 0.000000e+00 : f32
      %66 = vector.broadcast %cst_12 : f32 to vector<1x8x1xf32>
      %67 = vector.extract_strided_slice %31 {offsets = [0, 0, 0], sizes = [1, 8, 15], strides = [1, 1, 1]} : vector<1x8x16xf32> to vector<1x8x15xf32>
      %68 = tpu.concatenate %66, %67 in 2 : vector<1x8x1xf32>, vector<1x8x15xf32> -> vector<1x8x16xf32>
      %69 = vector.broadcast %16 : f32 to vector<1x8x16xf32>
      %70 = arith.mulf %68, %69 : vector<1x8x16xf32>
      %71 = arith.addf %65, %70 : vector<1x8x16xf32>
      %cst_13 = arith.constant 0.000000e+00 : f32
      %72 = vector.broadcast %cst_13 : f32 to vector<1x8x1xf32>
      %73 = vector.extract_strided_slice %31 {offsets = [0, 0, 1], sizes = [1, 8, 15], strides = [1, 1, 1]} : vector<1x8x16xf32> to vector<1x8x15xf32>
      %74 = tpu.concatenate %73, %72 in 2 : vector<1x8x15xf32>, vector<1x8x1xf32> -> vector<1x8x16xf32>
      %75 = vector.broadcast %20 : f32 to vector<1x8x16xf32>
      %76 = arith.mulf %74, %75 : vector<1x8x16xf32>
      %77 = arith.addf %71, %76 : vector<1x8x16xf32>
      %c0_14 = arith.constant 0 : index
      %78 = arith.index_cast %arg5 : i32 to index
      %c0_15 = arith.constant 0 : index
      %c0_16 = arith.constant 0 : index
      %79 = vector.load %arg4[%c0_14, %78, %c0_15, %c0_16] : memref<1x4x16x16xf32, #tpu.memory_space<vmem>>, vector<1x1x8x16xf32>
      %80 = vector.shape_cast %79 : vector<1x1x8x16xf32> to vector<1x8x16xf32>
      %81 = vector.shape_cast %77 : vector<1x8x16xf32> to vector<1x1x8x16xf32>
      tpu.vector_store %arg4[%c0_14, %78, %c0_15, %c0_16], %81 {strides = array<i32>} : memref<1x4x16x16xf32, #tpu.memory_space<vmem>>, vector<1x1x8x16xf32>,
      %c0_17 = arith.constant 0 : index
      %82 = arith.index_cast %arg5 : i32 to index
      %c8_18 = arith.constant 8 : index
      %c0_19 = arith.constant 0 : index
      %83 = vector.load %arg2[%c0_17, %82, %c8_18, %c0_19] : memref<1x4x16x16xf32, #tpu.memory_space<vmem>>, vector<1x1x8x16xf32>
      %84 = vector.shape_cast %83 : vector<1x1x8x16xf32> to vector<1x8x16xf32>
      %cst_20 = arith.constant 0.000000e+00 : f32
      %85 = vector.broadcast %cst_20 : f32 to vector<1x1x16xf32>
      %c0_21 = arith.constant 0 : index
      %86 = arith.index_cast %arg5 : i32 to index
      %c7_22 = arith.constant 7 : index
      %c0_23 = arith.constant 0 : index
      %87 = vector.load %arg2[%c0_21, %86, %c7_22, %c0_23] : memref<1x4x16x16xf32, #tpu.memory_space<vmem>>, vector<1x1x8x16xf32>
      %88 = vector.shape_cast %87 : vector<1x1x8x16xf32> to vector<1x8x16xf32>
      %89 = vector.extract_strided_slice %84 {offsets = [0, 1, 0], sizes = [1, 7, 16], strides = [1, 1, 1]} : vector<1x8x16xf32> to vector<1x7x16xf32>
      %90 = tpu.concatenate %89, %85 in 1 : vector<1x7x16xf32>, vector<1x1x16xf32> -> vector<1x8x16xf32>
      %91 = vector.broadcast %12 : f32 to vector<1x8x16xf32>
      %92 = arith.mulf %84, %91 : vector<1x8x16xf32>
      %93 = vector.broadcast %22 : f32 to vector<1x8x16xf32>
      %94 = arith.addf %92, %93 : vector<1x8x16xf32>
      %cst_24 = arith.constant 0.000000e+00 : f32
      %95 = vector.broadcast %cst_24 : f32 to vector<1x8x1xf32>
      %96 = vector.extract_strided_slice %84 {offsets = [0, 0, 0], sizes = [1, 8, 15], strides = [1, 1, 1]} : vector<1x8x16xf32> to vector<1x8x15xf32>
      %97 = tpu.concatenate %95, %96 in 2 : vector<1x8x1xf32>, vector<1x8x15xf32> -> vector<1x8x16xf32>
      %98 = vector.broadcast %10 : f32 to vector<1x8x16xf32>
      %99 = arith.mulf %97, %98 : vector<1x8x16xf32>
      %100 = arith.addf %94, %99 : vector<1x8x16xf32>
      %cst_25 = arith.constant 0.000000e+00 : f32
      %101 = vector.broadcast %cst_25 : f32 to vector<1x8x1xf32>
      %102 = vector.extract_strided_slice %84 {offsets = [0, 0, 1], sizes = [1, 8, 15], strides = [1, 1, 1]} : vector<1x8x16xf32> to vector<1x8x15xf32>
      %103 = tpu.concatenate %102, %101 in 2 : vector<1x8x15xf32>, vector<1x8x1xf32> -> vector<1x8x16xf32>
      %104 = vector.broadcast %14 : f32 to vector<1x8x16xf32>
      %105 = arith.mulf %103, %104 : vector<1x8x16xf32>
      %106 = arith.addf %100, %105 : vector<1x8x16xf32>
      %107 = vector.broadcast %6 : f32 to vector<1x8x16xf32>
      %108 = arith.mulf %88, %107 : vector<1x8x16xf32>
      %109 = arith.addf %106, %108 : vector<1x8x16xf32>
      %cst_26 = arith.constant 0.000000e+00 : f32
      %110 = vector.broadcast %cst_26 : f32 to vector<1x8x1xf32>
      %111 = vector.extract_strided_slice %88 {offsets = [0, 0, 0], sizes = [1, 8, 15], strides = [1, 1, 1]} : vector<1x8x16xf32> to vector<1x8x15xf32>
      %112 = tpu.concatenate %110, %111 in 2 : vector<1x8x1xf32>, vector<1x8x15xf32> -> vector<1x8x16xf32>
      %113 = vector.broadcast %4 : f32 to vector<1x8x16xf32>
      %114 = arith.mulf %112, %113 : vector<1x8x16xf32>
      %115 = arith.addf %109, %114 : vector<1x8x16xf32>
      %cst_27 = arith.constant 0.000000e+00 : f32
      %116 = vector.broadcast %cst_27 : f32 to vector<1x8x1xf32>
      %117 = vector.extract_strided_slice %88 {offsets = [0, 0, 1], sizes = [1, 8, 15], strides = [1, 1, 1]} : vector<1x8x16xf32> to vector<1x8x15xf32>
      %118 = tpu.concatenate %117, %116 in 2 : vector<1x8x15xf32>, vector<1x8x1xf32> -> vector<1x8x16xf32>
      %119 = vector.broadcast %8 : f32 to vector<1x8x16xf32>
      %120 = arith.mulf %118, %119 : vector<1x8x16xf32>
      %121 = arith.addf %115, %120 : vector<1x8x16xf32>
      %122 = vector.broadcast %18 : f32 to vector<1x8x16xf32>
      %123 = arith.mulf %90, %122 : vector<1x8x16xf32>
      %124 = arith.addf %121, %123 : vector<1x8x16xf32>
      %cst_28 = arith.constant 0.000000e+00 : f32
      %125 = vector.broadcast %cst_28 : f32 to vector<1x8x1xf32>
      %126 = vector.extract_strided_slice %90 {offsets = [0, 0, 0], sizes = [1, 8, 15], strides = [1, 1, 1]} : vector<1x8x16xf32> to vector<1x8x15xf32>
      %127 = tpu.concatenate %125, %126 in 2 : vector<1x8x1xf32>, vector<1x8x15xf32> -> vector<1x8x16xf32>
      %128 = vector.broadcast %16 : f32 to vector<1x8x16xf32>
      %129 = arith.mulf %127, %128 : vector<1x8x16xf32>
      %130 = arith.addf %124, %129 : vector<1x8x16xf32>
      %cst_29 = arith.constant 0.000000e+00 : f32
      %131 = vector.broadcast %cst_29 : f32 to vector<1x8x1xf32>
      %132 = vector.extract_strided_slice %90 {offsets = [0, 0, 1], sizes = [1, 8, 15], strides = [1, 1, 1]} : vector<1x8x16xf32> to vector<1x8x15xf32>
      %133 = tpu.concatenate %132, %131 in 2 : vector<1x8x15xf32>, vector<1x8x1xf32> -> vector<1x8x16xf32>
      %134 = vector.broadcast %20 : f32 to vector<1x8x16xf32>
      %135 = arith.mulf %133, %134 : vector<1x8x16xf32>
      %136 = arith.addf %130, %135 : vector<1x8x16xf32>
      %c0_30 = arith.constant 0 : index
      %137 = arith.index_cast %arg5 : i32 to index
      %c8_31 = arith.constant 8 : index
      %c0_32 = arith.constant 0 : index
      %138 = vector.load %arg4[%c0_30, %137, %c8_31, %c0_32] : memref<1x4x16x16xf32, #tpu.memory_space<vmem>>, vector<1x1x8x16xf32>
      %139 = vector.shape_cast %138 : vector<1x1x8x16xf32> to vector<1x8x16xf32>
      %140 = vector.shape_cast %136 : vector<1x8x16xf32> to vector<1x1x8x16xf32>
      tpu.vector_store %arg4[%c0_30, %137, %c8_31, %c0_32], %140 {strides = array<i32>} : memref<1x4x16x16xf32, #tpu.memory_space<vmem>>, vector<1x1x8x16xf32>,
    }
    %c4_i32_1 = arith.constant 4 : i32
    return
  }
  func.func @transform_0(%arg0: i32, %arg1: i32) -> (i32, i32, i32, i32) {
    %c0_i32 = arith.constant 0 : i32
    %c0_i32_0 = arith.constant 0 : i32
    %c0_i32_1 = arith.constant 0 : i32
    return %arg1, %arg0, %c0_i32, %c0_i32_0 : i32, i32, i32, i32
  }
  func.func @transform_1(%arg0: i32, %arg1: i32) -> (i32, i32) {
    %c0_i32 = arith.constant 0 : i32
    %c0_i32_0 = arith.constant 0 : i32
    %c0_i32_1 = arith.constant 0 : i32
    return %c0_i32, %c0_i32_0 : i32, i32
  }
  func.func @transform_2(%arg0: i32, %arg1: i32) -> (i32, i32, i32, i32) {
    %c0_i32 = arith.constant 0 : i32
    %c0_i32_0 = arith.constant 0 : i32
    %c0_i32_1 = arith.constant 0 : i32
    return %arg1, %arg0, %c0_i32, %c0_i32_0 : i32, i32, i32, i32
  }
}

</mosaic_0001>

<llo_original>
// kernel: tpu_custom_call.1
$region0: #{tpu_custom_call.1}
  #allocation0 [shape = 'u32[]', space=smem, size = 0x4, offset = 0x4, fixed_abs, tag = 'smem constant byte address 0x4 - core index']
  #allocation1 [shape = 'u32[72,128]{1,0:T(1,128)}', space=vmem, size = 0x9000, scoped, tag = 'internal scratch']
  %s0 = inlined_call_operand.hbm [shape: f32[2,4,16,16], index: 0, kind: input, shape index: {}]
  %s1 = inlined_call_operand.vmem [shape: f32[10,4], index: 1, kind: input, shape index: {}]
  %s2 = inlined_call_operand.hbm [shape: f32[2,4,16,16], index: 2, kind: output, shape index: {}]
  %s3 = sld [smem:[#allocation0]]
  $region56: #{tpu_custom_call.1} parent=0
    _
  %s5 = ssub.s32 1, %s3
  %s6 = scalar_select 0, %s5, %s3
  $region1: #{tpu_custom_call.1} parent=0
    #allocation2 [shape = 'u8[65536]{0}', space=vmem, size = 0x10000, scoped, tag = 'input window, operand 0']
    #allocation3 [shape = 's32[2]{0}', space=sflag, size = 0x8, scoped, tag = 'scoped memory for tpu_custom_call.1']
    #allocation4 [shape = 's32[2]{0}', space=sflag, size = 0x8, scoped, tag = 'scoped memory for tpu_custom_call.1']
    #allocation5 [shape = 's32[2]{0}', space=sflag, size = 0x8, scoped, tag = 'scoped memory for tpu_custom_call.1']
    #allocation6 [shape = 'u8[8192]{0}', space=smem, size = 0x2000, scoped, tag = 'input window, operand 1, single buffered']
    #allocation7 [shape = 'u8[65536]{0}', space=vmem, size = 0x10000, scoped, tag = 'output window, operand 0']
    %7 = vsyncpa [#allocation3], 0
    %s8 = scalar_lea.sflag [#allocation3], 1
    %9 = vsyncpa %s8, 0
    %10 = vsyncpa [#allocation5], 0
    %11 = vsyncpa [#allocation4], 0
    %s12 = scalar_lea.sflag [#allocation4], 1
    %13 = vsyncpa %s12, 0
    loop: start=0, step=1, limit=4
    $region2: #{tpu_custom_call.1} parent=1 // loop_pre_header
      _
    $region3: #{tpu_custom_call.1} parent=1 // loop_header
      %s15 = sphi 0, %s19
      %p16 = scmp.ge.s32.totalorder %s15, 4
      %s22 = sphi 0, %s34
      %s23 = sphi 0, %s30
      %s24 = sphi 0, %s22
      %s25 = sphi 0, %s23
      %s26 = sphi 0, %s24
      %s27 = sphi 0, %s25
      %s39 = sphi 0, %s41
      %s42 = sphi 0, %s39
      %s43 = sphi 0, %s42
      %s59 = sphi 0, %s43
      %s63 = sphi 0, %s63
      %s65 = sphi 0, %s63
      %s66 = sphi 0, %s65
      %s80 = sphi 0, %s66
      %s88 = sphi 0, %s90
      %s91 = sphi 0, %s88
      %s92 = sphi 0, %s91
      %s108 = sphi 0, %s92
    $region4: #{tpu_custom_call.1} parent=1 // loop_header_branch
      %18 = sbr.rel (%p16) target = $region8
    $region5: #{tpu_custom_call.1} parent=1 // loop_body
      %s20 = ssub.s32 %s15, 1
      %s21 = ssub.s32 %s15, 2
      %s28 = sadd.s32 1, %s23
      %p29 = scmp.ge.s32.totalorder %s28, 2
      %s30 = scalar_select %p29, 0, %s28
      %s31 = sadd.s32 1, %s22
      %s32 = scalar_select %p29, %s31, %s22
      %p33 = scmp.ge.s32.totalorder %s32, 1
      %s34 = scalar_select %p33, 0, %s32
      %s35 = ssub.s32 %s23, %s30
      %s36 = ssub.s32 %s22, %s34
      %s37 = sor.u32 %s35, %s36
      %p38 = scmp.eq.s32.totalorder %s37, 0
      %s40 = sadd.s32 %s39, 1
      %s41 = scalar_select %p38, %s39, %s40
      %p44 = pneg %p38
      %p45 = scmp.eq.s32.totalorder %s15, 1
      %p46 = por %p44, %p45
      %p47 = scmp.ne.s32.totalorder %s39, %s42
      %p48 = scmp.eq.s32.totalorder %s15, 0
      %p49 = por %p47, %p48
      %p50 = scmp.ne.s32.totalorder %s39, %s42
      %p51 = scmp.eq.s32.totalorder %s20, 1
      %p52 = por %p50, %p51
      %p53 = scmp.ne.s32.totalorder %s42, %s43
      %p54 = scmp.eq.s32.totalorder %s20, 0
      %p55 = por %p53, %p54
      %p56 = scmp.ne.s32.totalorder %s42, %s43
      %p57 = scmp.eq.s32.totalorder %s21, 1
      %p58 = por %p56, %p57
      %p60 = scmp.ne.s32.totalorder %s43, %s59
      %p61 = scmp.eq.s32.totalorder %s21, 0
      %p62 = por %p60, %p61
      %s64 = sadd.s32 %s63, 1
      %p67 = scmp.eq.s32.totalorder %s15, 1
      %p68 = scmp.ne.s32.totalorder %s63, %s65
      %p69 = scmp.eq.s32.totalorder %s15, 0
      %p70 = por %p68, %p69
      %p71 = scmp.ne.s32.totalorder %s63, %s65
      %p72 = scmp.eq.s32.totalorder %s20, 1
      %p73 = por %p71, %p72
      %p74 = scmp.ne.s32.totalorder %s65, %s66
      %p75 = scmp.eq.s32.totalorder %s20, 0
      %p76 = por %p74, %p75
      %p77 = scmp.ne.s32.totalorder %s65, %s66
      %p78 = scmp.eq.s32.totalorder %s21, 1
      %p79 = por %p77, %p78
      %p81 = scmp.ne.s32.totalorder %s66, %s80
      %p82 = scmp.eq.s32.totalorder %s21, 0
      %p83 = por %p81, %p82
      %s84 = ssub.s32 %s23, %s30
      %s85 = ssub.s32 %s22, %s34
      %s86 = sor.u32 %s84, %s85
      %p87 = scmp.eq.s32.totalorder %s86, 0
      %s89 = sadd.s32 %s88, 1
      %s90 = scalar_select %p87, %s88, %s89
      %p93 = pneg %p87
      %p94 = scmp.eq.s32.totalorder %s15, 1
      %p95 = por %p93, %p94
      %p96 = scmp.ne.s32.totalorder %s88, %s91
      %p97 = scmp.eq.s32.totalorder %s15, 0
      %p98 = por %p96, %p97
      %p99 = scmp.ne.s32.totalorder %s88, %s91
      %p100 = scmp.eq.s32.totalorder %s20, 1
      %p101 = por %p99, %p100
      %p102 = scmp.ne.s32.totalorder %s91, %s92
      %p103 = scmp.eq.s32.totalorder %s20, 0
      %p104 = por %p102, %p103
      %p105 = scmp.ne.s32.totalorder %s91, %s92
      %p106 = scmp.eq.s32.totalorder %s21, 1
      %p107 = por %p105, %p106
      %p109 = scmp.ne.s32.totalorder %s92, %s108
      %p110 = scmp.eq.s32.totalorder %s21, 0
      %p111 = por %p109, %p110
      %p112 = scmp.le.s32.totalorder 1, %s15
      %p113 = scmp.lt.s32.totalorder %s15, 3
      %p114 = pnand %p112, %p113
      %p115 = pneg %p114
      // Predicated region
      $region9: #{tpu_custom_call.1} parent=5 // pred_check
        _
      $region10: #{tpu_custom_call.1} parent=5 // pred_check_branch
        %117 = sbr.rel (%p114) target = $region12
      $region11: #{tpu_custom_call.1} parent=5 // pred_region
        %s118 = ssub.s32 %s15, 1
        // Predicated region
        $region13: #{tpu_custom_call.1} parent=11 // pred_check
          %p119 = pneg %p76
        $region14: #{tpu_custom_call.1} parent=11 // pred_check_branch
          %121 = sbr.rel (%p119) target = $region16
        $region15: #{tpu_custom_call.1} parent=11 // pred_region
          %123 = vsyncadd [#allocation5], 0
          %s124 = sshll.u32 %s1, 4
          %s125 = int_to_ptr.vmem [resolvable:$true] %s124
          %130 = dma.vmem_to_smem %s125, 256, [#allocation6], [#allocation5], 128, 128, 8
        $region16: #{tpu_custom_call.1} parent=11 // pred_fallthru
          _
      $region12: #{tpu_custom_call.1} parent=5 // pred_fallthru
        _
      %p131 = scmp.lt.s32.totalorder %s15, 2
      // Predicated region
      $region17: #{tpu_custom_call.1} parent=5 // pred_check
        %p132 = pneg %p131
      $region18: #{tpu_custom_call.1} parent=5 // pred_check_branch
        %134 = sbr.rel (%p132) target = $region20
      $region19: #{tpu_custom_call.1} parent=5 // pred_region
        // Predicated region
        $region21: #{tpu_custom_call.1} parent=19 // pred_check
          %p135 = pneg %p49
        $region22: #{tpu_custom_call.1} parent=19 // pred_check_branch
          %137 = sbr.rel (%p135) target = $region24
        $region23: #{tpu_custom_call.1} parent=19 // pred_region
          %s138 = sand.u32 %s39, 1
          %s139 = scalar_lea.sflag [#allocation3], %s138
          %s140 = sand.u32 %s39, 1
          %s141 = smul.addr %s140, 64
          %s142 = scalar_lea.vmem [#allocation2], %s141
          %s143 = smul.u32 4, %s22
          %145 = vsyncadd %s139, 0
          %s146 = smul.addr %s143, 2
          %s147 = smul.addr %s23, 8
          %s148 = sadd.s32 %s146, %s147
          %s149 = smul.addr %s148, 8
          %s150 = scalar_lea.hbm %s0, %s149
          %s151 = sshll.u32 %s150, 4
          %s152 = int_to_ptr.hbm [resolvable:$true] %s151
          %s153 = sshll.u32 %s142, 4
          %s154 = int_to_ptr.vmem [resolvable:$true] %s153
          %159 = dma.hbm_to_vmem [thread:$0]  %s152, 1024, %s154, %s139, 128, 128, 8
        $region24: #{tpu_custom_call.1} parent=19 // pred_fallthru
          _
      $region20: #{tpu_custom_call.1} parent=5 // pred_fallthru
        _
      %p160 = scmp.le.s32.totalorder 1, %s15
      %p161 = scmp.lt.s32.totalorder %s15, 3
      %p162 = pnand %p160, %p161
      %p163 = pneg %p162
      // Predicated region
      $region25: #{tpu_custom_call.1} parent=5 // pred_check
        _
      $region26: #{tpu_custom_call.1} parent=5 // pred_check_branch
        %165 = sbr.rel (%p162) target = $region28
      $region27: #{tpu_custom_call.1} parent=5 // pred_region
        %s166 = ssub.s32 %s15, 1
        %s167 = sand.u32 %s42, 1
        %s168 = scalar_lea.sflag [#allocation3], %s167
        %s169 = sand.u32 %s42, 1
        %s170 = smul.addr %s169, 64
        %s171 = scalar_lea.vmem [#allocation2], %s170
        // Predicated region
        $region29: #{tpu_custom_call.1} parent=27 // pred_check
          %p172 = pneg %p55
        $region30: #{tpu_custom_call.1} parent=27 // pred_check_branch
          %174 = sbr.rel (%p172) target = $region32
        $region31: #{tpu_custom_call.1} parent=27 // pred_region
          %176 = dma.done %s168, 1024
        $region32: #{tpu_custom_call.1} parent=27 // pred_fallthru
          _
        // Predicated region
        $region33: #{tpu_custom_call.1} parent=27 // pred_check
          %p177 = pneg %p76
        $region34: #{tpu_custom_call.1} parent=27 // pred_check_branch
          %179 = sbr.rel (%p177) target = $region36
        $region35: #{tpu_custom_call.1} parent=27 // pred_region
          %181 = dma.done [#allocation5], 256
        $region36: #{tpu_custom_call.1} parent=27 // pred_fallthru
          _
        %182 = sfence
        %s183 = sand.u32 %s42, 1
        %s184 = scalar_lea.sflag [#allocation3], %s183
        %s185 = sand.u32 %s42, 1
        %s186 = smul.addr %s185, 64
        %s187 = scalar_lea.vmem [#allocation2], %s186
        %p188 = pneg %p55
        %p189 = pneg %p52
        %p190 = pneg %p76
        %p191 = pneg %p73
        %p192 = pneg %p104
        %p193 = pneg %p101
        %s194 = sand.u32 %s91, 1
        %s195 = scalar_lea.sflag [#allocation4], %s194
        %s196 = sand.u32 %s91, 1
        %s197 = smul.addr %s196, 64
        %s198 = scalar_lea.vmem [#allocation7], %s197
        %s199 = smul.u32 4, %s24
        %s200 = smul.u32 4, %s24
        %s201 = smul.u32 %s24, 4
        loop: start=0, step=1, limit=4
        $region37: #{tpu_custom_call.1} parent=27 // loop_pre_header
          _
        $region38: #{tpu_custom_call.1} parent=27 // loop_header
          %s203 = sphi 0, %s207
          %p204 = scmp.ge.s32.totalorder %s203, 4
        $region39: #{tpu_custom_call.1} parent=27 // loop_header_branch
          %206 = sbr.rel (%p204) target = $region43
        $region40: #{tpu_custom_call.1} parent=27 // loop_body
          %s208 = sadd.s32 %s201, %s203
          %s209 = sld [smem:[#allocation6 + %s208]]
          %s210 = sshra.s32 %s208, 7
          %s211 = sand.u32 %s208, 127
          %s212 = sadd.s32 %s210, 1
          %s213 = smul.u32 %s212, 128
          %s214 = sshra.s32 %s208, 7
          %s215 = sand.u32 %s208, 127
          %s216 = sadd.s32 %s213, %s215
          %s217 = sld [smem:[#allocation6 + %s216]]
          %s218 = sadd.s32 %s210, 2
          %s219 = smul.u32 %s218, 128
          %s220 = sadd.s32 %s219, %s215
          %s221 = sld [smem:[#allocation6 + %s220]]
          %s222 = sadd.s32 %s210, 3
          %s223 = smul.u32 %s222, 128
          %s224 = sadd.s32 %s223, %s215
          %s225 = sld [smem:[#allocation6 + %s224]]
          %s226 = sadd.s32 %s210, 4
          %s227 = smul.u32 %s226, 128
          %s228 = sadd.s32 %s227, %s215
          %s229 = sld [smem:[#allocation6 + %s228]]
          %s230 = sadd.s32 %s210, 5
          %s231 = smul.u32 %s230, 128
          %s232 = sadd.s32 %s231, %s215
          %s233 = sld [smem:[#allocation6 + %s232]]
          %s234 = sadd.s32 %s210, 6
          %s235 = smul.u32 %s234, 128
          %s236 = sadd.s32 %s235, %s215
          %s237 = sld [smem:[#allocation6 + %s236]]
          %s238 = sadd.s32 %s210, 7
          %s239 = smul.u32 %s238, 128
          %s240 = sadd.s32 %s239, %s215
          %s241 = sld [smem:[#allocation6 + %s240]]
          %s242 = sadd.s32 %s210, 8
          %s243 = smul.u32 %s242, 128
          %s244 = sadd.s32 %s243, %s215
          %s245 = sld [smem:[#allocation6 + %s244]]
          %s246 = sadd.s32 %s210, 9
          %s247 = smul.u32 %s246, 128
          %s248 = sadd.s32 %s247, %s215
          %s249 = sld [smem:[#allocation6 + %s248]]
          %s250 = smul.u32 %s203, 16
          %s251 = scalar_lea.vmem %s171, %s250 [#allocation2]
          %v252 = vld [vmem:[%s251] sm:$0xff]
          %v254 = vrot.slane %v252, 7
          %vm256 = vcmask 1040384
          %v257 = vsel %vm256, 0.0, %v254
          %v258 = vld [vmem:[%s251 + $0x1] sm:$0xff]
          %v259 = vstv %s229
          %v260 = vmul.f32 %v252, %v259
          %v261 = vstv %s249
          %v262 = vadd.f32 %v260, %v261
          %263 = vrot.lane.b32.xlu0 %v252, 1
          %v264 = vpop.permute.xlu0 %263
          %vm266 = vcmask 7168
          %v267 = vsel %vm266, 0.0, %v264
          %v268 = vstv %s225
          %v269 = vmul.f32 %v267, %v268
          %v270 = vadd.f32 %v262, %v269
          %271 = vrot.lane.b32.xlu0 %v252, 127
          %v272 = vpop.permute.xlu0 %271
          %vm274 = vcmask 121856
          %v275 = vsel %vm274, %v272, 0.0
          %v276 = vstv %s233
          %v277 = vmul.f32 %v275, %v276
          %v278 = vadd.f32 %v270, %v277
          %v279 = vstv %s217
          %v280 = vmul.f32 %v257, %v279
          %v281 = vadd.f32 %v278, %v280
          %283 = vrot.lane.b32.xlu0 %v257, 1
          %v284 = vpop.permute.xlu0 %283
          %v286 = vsel %vm266, 0.0, %v284
          %v287 = vstv %s209
          %v288 = vmul.f32 %v286, %v287
          %v289 = vadd.f32 %v281, %v288
          %290 = vrot.lane.b32.xlu0 %v257, 127
          %v291 = vpop.permute.xlu0 %290
          %v293 = vsel %vm274, %v291, 0.0
          %v294 = vstv %s221
          %v295 = vmul.f32 %v293, %v294
          %v296 = vadd.f32 %v289, %v295
          %v297 = vstv %s241
          %v298 = vmul.f32 %v258, %v297
          %v299 = vadd.f32 %v296, %v298
          %301 = vrot.lane.b32.xlu0 %v258, 1
          %v302 = vpop.permute.xlu0 %301
          %v304 = vsel %vm266, 0.0, %v302
          %v305 = vstv %s237
          %v306 = vmul.f32 %v304, %v305
          %v307 = vadd.f32 %v299, %v306
          %308 = vrot.lane.b32.xlu0 %v258, 127
          %v309 = vpop.permute.xlu0 %308
          %v311 = vsel %vm274, %v309, 0.0
          %v312 = vstv %s245
          %v313 = vmul.f32 %v311, %v312
          %v314 = vadd.f32 %v307, %v313
          %s315 = scalar_lea.vmem %s198, %s250 [#allocation7]
          %vm316 = vcmask 130048
          %317 = vst.msk [vmem:[%s315] sm:$0xff] %vm316, %v314
          %v318 = vld [vmem:[%s251 + $0x8] sm:$0xff]
          %v319 = vld [vmem:[%s251 + $0x7] sm:$0xff]
          %v321 = vrot.slane %v318, 1
          %vm323 = vcmask 1046528
          %v324 = vsel %vm323, %v321, 0.0
          %v325 = vmul.f32 %v318, %v259
          %v326 = vadd.f32 %v325, %v261
          %327 = vrot.lane.b32.xlu0 %v318, 1
          %v328 = vpop.permute.xlu0 %327
          %v330 = vsel %vm266, 0.0, %v328
          %v331 = vmul.f32 %v330, %v268
          %v332 = vadd.f32 %v326, %v331
          %333 = vrot.lane.b32.xlu0 %v318, 127
          %v334 = vpop.permute.xlu0 %333
          %v336 = vsel %vm274, %v334, 0.0
          %v337 = vmul.f32 %v336, %v276
          %v338 = vadd.f32 %v332, %v337
          %v339 = vmul.f32 %v319, %v279
          %v340 = vadd.f32 %v338, %v339
          %342 = vrot.lane.b32.xlu0 %v319, 1
          %v343 = vpop.permute.xlu0 %342
          %v345 = vsel %vm266, 0.0, %v343
          %v346 = vmul.f32 %v345, %v287
          %v347 = vadd.f32 %v340, %v346
          %348 = vrot.lane.b32.xlu0 %v319, 127
          %v349 = vpop.permute.xlu0 %348
          %v351 = vsel %vm274, %v349, 0.0
          %v352 = vmul.f32 %v351, %v294
          %v353 = vadd.f32 %v347, %v352
          %v354 = vmul.f32 %v324, %v297
          %v355 = vadd.f32 %v353, %v354
          %357 = vrot.lane.b32.xlu0 %v324, 1
          %v358 = vpop.permute.xlu0 %357
          %v360 = vsel %vm266, 0.0, %v358
          %v361 = vmul.f32 %v360, %v305
          %v362 = vadd.f32 %v355, %v361
          %363 = vrot.lane.b32.xlu0 %v324, 127
          %v364 = vpop.permute.xlu0 %363
          %v366 = vsel %vm274, %v364, 0.0
          %v367 = vmul.f32 %v366, %v312
          %v368 = vadd.f32 %v362, %v367
          %369 = vst.msk [vmem:[%s315 + $0x8] sm:$0xff] %vm316, %v368
        $region41: #{tpu_custom_call.1} parent=27 // loop_footer
          %s207 = sadd.s32 1, %s203
        $region42: #{tpu_custom_call.1} parent=27 // loop_footer_branch
          %202 = sbr.rel target = $region38
        $region43: #{tpu_custom_call.1} parent=27 // loop_exit
          _
        %s370 = sand.u32 %s91, 1
        %s371 = scalar_lea.sflag [#allocation4], %s370
        %s372 = sand.u32 %s91, 1
        %s373 = smul.addr %s372, 64
        %s374 = scalar_lea.vmem [#allocation7], %s373
        // Predicated region
        $region44: #{tpu_custom_call.1} parent=27 // pred_check
          %p375 = pneg %p101
        $region45: #{tpu_custom_call.1} parent=27 // pred_check_branch
          %377 = sbr.rel (%p375) target = $region47
        $region46: #{tpu_custom_call.1} parent=27 // pred_region
          %s378 = smul.u32 4, %s24
          %380 = vsyncadd %s371, 0
          %s381 = smul.addr %s378, 2
          %s382 = smul.addr %s25, 8
          %s383 = sadd.s32 %s381, %s382
          %s384 = smul.addr %s383, 8
          %s385 = scalar_lea.hbm %s2, %s384
          %s386 = sshll.u32 %s374, 4
          %s387 = int_to_ptr.vmem [resolvable:$true] %s386
          %s388 = sshll.u32 %s385, 4
          %s389 = int_to_ptr.hbm [resolvable:$true] %s388
          %394 = dma.vmem_to_hbm [thread:$0]  %s387, 1024, %s389, %s371, 128, 128, 8
        $region47: #{tpu_custom_call.1} parent=27 // pred_fallthru
          _
      $region28: #{tpu_custom_call.1} parent=5 // pred_fallthru
        _
      %p395 = scmp.le.s32.totalorder 2, %s15
      // Predicated region
      $region48: #{tpu_custom_call.1} parent=5 // pred_check
        %p396 = pneg %p395
      $region49: #{tpu_custom_call.1} parent=5 // pred_check_branch
        %398 = sbr.rel (%p396) target = $region51
      $region50: #{tpu_custom_call.1} parent=5 // pred_region
        %s399 = ssub.s32 %s15, 2
        // Predicated region
        $region52: #{tpu_custom_call.1} parent=50 // pred_check
          %p400 = pneg %p107
        $region53: #{tpu_custom_call.1} parent=50 // pred_check_branch
          %402 = sbr.rel (%p400) target = $region55
        $region54: #{tpu_custom_call.1} parent=50 // pred_region
          %s403 = sand.u32 %s92, 1
          %s404 = scalar_lea.sflag [#allocation4], %s403
          %s405 = sand.u32 %s92, 1
          %s406 = smul.addr %s405, 64
          %s407 = scalar_lea.vmem [#allocation7], %s406
          %409 = dma.done %s404, 1024
        $region55: #{tpu_custom_call.1} parent=50 // pred_fallthru
          _
      $region51: #{tpu_custom_call.1} parent=5 // pred_fallthru
        _
    $region6: #{tpu_custom_call.1} parent=1 // loop_footer
      %s19 = sadd.s32 1, %s15
    $region7: #{tpu_custom_call.1} parent=1 // loop_footer_branch
      %14 = sbr.rel target = $region3
    $region8: #{tpu_custom_call.1} parent=1 // loop_exit
      _
    %410 = vsyncpa [#allocation3], 1
    %s411 = scalar_lea.sflag [#allocation3], 1
    %412 = vsyncpa %s411, 1
    %413 = vsyncpa [#allocation4], 1
    %s414 = scalar_lea.sflag [#allocation4], 1
    %415 = vsyncpa %s414, 1
    %416 = vsyncpa [#allocation5], 1
    %s417 = scalar_lea.sflag [#allocation5], 1
    %418 = vsyncpa %s417, 1

</llo_original>
